<compile_context>
chip_gen: v7x
topology: tpu7x:2x2x1
jax: 0.10.0
libtpu: 0.0.40
codegen_flags: <defaults>
</compile_context>

<pallas_src>
import numpy as np
import jax
import jax.numpy as jnp
from jax.experimental import pallas as pl
from jax.experimental.pallas import tpu as pltpu


# ----------------------------------------------------------------------------
# Bilinear interpolation matrices (align_corners=True), built host-side.
# ----------------------------------------------------------------------------
def _interp_matrix(out_size: int, in_size: int) -> np.ndarray:
    m = np.zeros((out_size, in_size), dtype=np.float32)
    if out_size == 1 or in_size == 1:
        m[:, 0] = 1.0
        return m
    scale = (in_size - 1) / (out_size - 1)
    for i in range(out_size):
        src = i * scale
        i0 = min(int(np.floor(src)), in_size - 1)
        i1 = min(i0 + 1, in_size - 1)
        frac = src - i0
        m[i, i0] += 1.0 - frac
        m[i, i1] += frac
    return m


def _vmem_capacity_bytes() -> int:
    try:
        return int(pltpu.get_tpu_info().vmem_capacity_bytes)
    except Exception:
        return 64 << 20  # conservative: v7x per-TC physical VMEM


# ----------------------------------------------------------------------------
# Fused kernel:  out = relu( W2s @ x2  +  (W1s @ x1) @ K^T  +  shift )
#   x2 block : (1, C2, THW)     -- hi-res input, HW on lanes
#   x1 block : (1, C1, H1W1)    -- full low-res input per batch element
#   kT block : (H1W1, THW)      -- composed bilinear matrix (kron(Wh, Ww)^T)
#   out block: (1, Cout, THW)   -- lane-dense
# ----------------------------------------------------------------------------
def _fused_up_kernel(x2_ref, x1_ref, kt_ref, w2_ref, w1_ref, shift_ref, o_ref):
    # Channel contraction on the low-res input first (commutes with the
    # bilinear interpolation), then one lane-dense MXU matmul for the upsample.
    t = jnp.dot(w1_ref[...], x1_ref[0],
                preferred_element_type=jnp.float32)            # (Cout, H1W1)
    up = jnp.dot(t.astype(kt_ref.dtype), kt_ref[...],
                 preferred_element_type=jnp.float32)           # (Cout, THW)
    acc = jnp.dot(w2_ref[...], x2_ref[0],
                  preferred_element_type=jnp.float32)          # (Cout, THW)
    o_ref[0] = jnp.maximum(acc + up + shift_ref[...], 0.0)


def up_forward(x1, x2, params, eps=1e-5, *,
               compute_dtype=jnp.float32, hw_tile_max=16384):
    """x1: (N, C1, H1, W1), x2: (N, C2, H2, W2) -> (N, Cout, H2, W2)."""
    N, C1, H1, W1 = x1.shape
    _, C2, H2, W2 = x2.shape
    Cout = params["conv_w"].shape[0]
    HW = H2 * W2
    H1W1 = H1 * W1
    in_bytes = jnp.dtype(compute_dtype).itemsize

    # ---- fold eval-mode BN into the conv weight, split by concat order [x2, x1]
    inv_std = 1.0 / jnp.sqrt(params["bn_var"] + eps)
    scale = params["bn_gamma"] * inv_std
    shift = (params["bn_beta"] - params["bn_mean"] * scale).astype(jnp.float32)
    w_scaled = params["conv_w"] * scale[:, None]               # (Cout, C2+C1)
    w2s = w_scaled[:, :C2].astype(compute_dtype)
    w1s = w_scaled[:, C2:].astype(compute_dtype)
    shift2 = shift.reshape(Cout, 1)

    # ---- composed bilinear matrix: x1u_flat = x1_flat @ kron(Wh, Ww)^T
    wh = _interp_matrix(H2, H1)                                # (H2, H1)
    ww = _interp_matrix(W2, W1)                                # (W2, W1)
    kt = jnp.asarray(np.kron(wh, ww).T, dtype=compute_dtype)   # (H1W1, HW)

    x2f = x2.reshape(N, C2, HW).astype(compute_dtype)          # free reshape
    x1f = x1.reshape(N, C1, H1W1).astype(compute_dtype)        # free reshape

    # ---- spatial (lane) tile: lane-dense, VMEM-aware, >=2 grid steps if possible
    cap = _vmem_capacity_bytes()
    budget = min(cap // 2, 48 << 20)                           # double-buffered blocks

    def step_bytes(t):
        buf = ((C2 * t + C1 * H1W1 + H1W1 * t) * in_bytes      # x2, x1, kT blocks
               + (Cout * (C1 + C2)) * in_bytes + Cout * 4      # weights + shift
               + Cout * t * 4)                                 # f32 output block
        return 2 * buf                                         # double buffering

    if HW <= hw_tile_max:
        thw = HW
    else:
        thw = max(128, (hw_tile_max // 128) * 128)
    while thw > 128 and step_bytes(thw) > budget:
        thw = max(128, ((thw // 2) // 128) * 128)
    # guarantee >=2 grid steps for v7x's dual TensorCores / pipelining
    if N * pl.cdiv(HW, thw) < 2 and HW > 256:
        thw = max(128, ((pl.cdiv(HW, 2) + 127) // 128) * 128)

    nj = pl.cdiv(HW, thw)
    vmem_limit = int(min(cap, step_bytes(thw) + (16 << 20)))

    flops = 2 * N * (Cout * C2 * HW + nj * Cout * C1 * H1W1 + Cout * H1W1 * HW)
    bytes_accessed = int(N * C2 * HW * in_bytes
                         + N * nj * C1 * H1W1 * in_bytes
                         + H1W1 * HW * in_bytes
                         + N * Cout * HW * 4
                         + (Cout * (C1 + C2) + Cout) * 4)
    cost = pl.CostEstimate(flops=int(flops), transcendentals=0,
                           bytes_accessed=bytes_accessed)

    out = pl.pallas_call(
        _fused_up_kernel,
        out_shape=jax.ShapeDtypeStruct((N, Cout, HW), jnp.float32),
        grid_spec=pltpu.PrefetchScalarGridSpec(
            num_scalar_prefetch=0,
            # batch innermost: the kT spatial tile stays VMEM-resident across N.
            grid=(nj, N),
            in_specs=[
                pl.BlockSpec((1, C2, thw), lambda j, n: (n, 0, j)),
                pl.BlockSpec((1, C1, H1W1), lambda j, n: (n, 0, 0)),
                pl.BlockSpec((H1W1, thw), lambda j, n: (0, j)),
                pl.BlockSpec((Cout, C2), lambda j, n: (0, 0)),
                pl.BlockSpec((Cout, C1), lambda j, n: (0, 0)),
                pl.BlockSpec((Cout, 1), lambda j, n: (0, 0)),
            ],
            out_specs=pl.BlockSpec((1, Cout, thw), lambda j, n: (n, 0, j)),
        ),
        compiler_params=pltpu.CompilerParams(
            dimension_semantics=("parallel", "parallel"),
            vmem_limit_bytes=vmem_limit),
        cost_estimate=cost,
    )(x2f, x1f, kt, w2s, w1s, shift2)

    return out.reshape(N, Cout, H2, W2)                        # free reshape


# ----------------------------------------------------------------------------
# Pure-JAX reference for correctness check.
# ----------------------------------------------------------------------------
def up_forward_ref(x1, x2, params, eps=1e-5):
    H2, W2 = x2.shape[2], x2.shape[3]
    H1, W1 = x1.shape[2], x1.shape[3]
    wh = jnp.asarray(_interp_matrix(H2, H1))
    ww = jnp.asarray(_interp_matrix(W2, W1))
    x1_up = jnp.einsum("oh,nchw,pw->ncop", wh, x1, ww)
    x_cat = jnp.concatenate([x2, x1_up], axis=1)
    y = jnp.einsum("oc,nchw->nohw", params["conv_w"], x_cat)
    inv_std = 1.0 / jnp.sqrt(params["bn_var"] + eps)
    scale = (params["bn_gamma"] * inv_std)[None, :, None, None]
    shift = (params["bn_beta"]
             - params["bn_mean"] * params["bn_gamma"] * inv_std)[None, :, None, None]
    return jnp.maximum(y * scale + shift, 0.0)


if __name__ == "__main__":
    # Small shapes: x1 (N, C1, H1, W1), x2 (N, C2, H2, W2); in_channels = C1 + C2.
    N, C1, H1, W1 = 2, 4, 8, 8
    C2, H2, W2 = 4, 16, 16
    in_channels = C1 + C2   # 8
    out_channels = 8

    key = jax.random.PRNGKey(0)
    k1, k2, k3, k4, k5 = jax.random.split(key, 5)
    x1 = jax.random.normal(k1, (N, C1, H1, W1), dtype=jnp.float32)
    x2 = jax.random.normal(k2, (N, C2, H2, W2), dtype=jnp.float32)

    params = {
        "conv_w": jax.random.normal(k3, (out_channels, in_channels),
                                    dtype=jnp.float32) * 0.1,
        "bn_gamma": jnp.ones((out_channels,), jnp.float32)
                    + 0.05 * jnp.arange(out_channels, dtype=jnp.float32),
        "bn_beta": 0.01 * jnp.arange(out_channels, dtype=jnp.float32),
        "bn_mean": 0.1 * jax.random.normal(k4, (out_channels,), dtype=jnp.float32),
        "bn_var": jnp.abs(jax.random.normal(k5, (out_channels,),
                                            dtype=jnp.float32)) + 0.5,
    }

    out = up_forward(x1, x2, params)
    out = jax.block_until_ready(out)

    ref = up_forward_ref(x1, x2, params)
    np.testing.assert_allclose(np.asarray(out), np.asarray(ref),
                               rtol=1e-4, atol=1e-4)
    print("KERNEL_OK")
</pallas_src>

<mosaic_0001>
module attributes {stable_mosaic.version = 11 : i64} {
  func.func @_fused_up_kernel(%arg0: i32, %arg1: i32, %arg2: memref<1x4x256xf32, #tpu.memory_space<vmem>>, %arg3: memref<1x4x64xf32, #tpu.memory_space<vmem>>, %arg4: memref<64x256xf32, #tpu.memory_space<vmem>>, %arg5: memref<8x4xf32, #tpu.memory_space<vmem>>, %arg6: memref<8x4xf32, #tpu.memory_space<vmem>>, %arg7: memref<8x1xf32, #tpu.memory_space<vmem>>, %arg8: memref<1x8x256xf32, #tpu.memory_space<vmem>>) attributes {dimension_semantics = [#tpu.dimension_semantics<parallel>, #tpu.dimension_semantics<parallel>], iteration_bounds = array<i64: 1, 2>, scalar_prefetch = 0 : i64, scratch_operands = 0 : i64, tpu.core_type = #tpu.core_type<tc>, window_params = [{transform_indices = @transform_0, window_bounds = array<i64: 1, 4, 256>}, {transform_indices = @transform_1, window_bounds = array<i64: 1, 4, 64>}, {transform_indices = @transform_2, window_bounds = array<i64: 64, 256>}, {pipeline_mode = #tpu.pipeline_mode<synchronous>, transform_indices = @transform_3, window_bounds = array<i64: 8, 4>}, {pipeline_mode = #tpu.pipeline_mode<synchronous>, transform_indices = @transform_4, window_bounds = array<i64: 8, 4>}, {pipeline_mode = #tpu.pipeline_mode<synchronous>, transform_indices = @transform_5, window_bounds = array<i64: 8, 1>}, {transform_indices = @transform_6, window_bounds = array<i64: 1, 8, 256>}]} {
    %c0 = arith.constant 0 : index
    %c0_0 = arith.constant 0 : index
    %0 = vector.load %arg6[%c0, %c0_0] : memref<8x4xf32, #tpu.memory_space<vmem>>, vector<8x4xf32>
    %c0_1 = arith.constant 0 : index
    %c0_2 = arith.constant 0 : index
    %c0_3 = arith.constant 0 : index
    %1 = vector.load %arg3[%c0_1, %c0_2, %c0_3] : memref<1x4x64xf32, #tpu.memory_space<vmem>>, vector<1x4x64xf32>
    %2 = vector.shape_cast %1 : vector<1x4x64xf32> to vector<4x64xf32>
    %cst = arith.constant dense<0.000000e+00> : vector<8x64xf32>
    %3 = tpu.matmul %0, %2, %cst {dimension_numbers = #tpu.dot_dimension_numbers<[1], [0], [0], [1], [0, 0, 1, 1], [], []>} : vector<8x4xf32>, vector<4x64xf32>, vector<8x64xf32> -> vector<8x64xf32>
    %c0_4 = arith.constant 0 : index
    %c0_5 = arith.constant 0 : index
    %4 = vector.load %arg4[%c0_4, %c0_5] : memref<64x256xf32, #tpu.memory_space<vmem>>, vector<64x256xf32>
    %cst_6 = arith.constant dense<0.000000e+00> : vector<8x256xf32>
    %5 = tpu.matmul %3, %4, %cst_6 {dimension_numbers = #tpu.dot_dimension_numbers<[1], [0], [0], [1], [0, 0, 1, 1], [], []>} : vector<8x64xf32>, vector<64x256xf32>, vector<8x256xf32> -> vector<8x256xf32>
    %c0_7 = arith.constant 0 : index
    %c0_8 = arith.constant 0 : index
    %6 = vector.load %arg5[%c0_7, %c0_8] : memref<8x4xf32, #tpu.memory_space<vmem>>, vector<8x4xf32>
    %c0_9 = arith.constant 0 : index
    %c0_10 = arith.constant 0 : index
    %c0_11 = arith.constant 0 : index
    %7 = vector.load %arg2[%c0_9, %c0_10, %c0_11] : memref<1x4x256xf32, #tpu.memory_space<vmem>>, vector<1x4x256xf32>
    %8 = vector.shape_cast %7 : vector<1x4x256xf32> to vector<4x256xf32>
    %cst_12 = arith.constant dense<0.000000e+00> : vector<8x256xf32>
    %9 = tpu.matmul %6, %8, %cst_12 {dimension_numbers = #tpu.dot_dimension_numbers<[1], [0], [0], [1], [0, 0, 1, 1], [], []>} : vector<8x4xf32>, vector<4x256xf32>, vector<8x256xf32> -> vector<8x256xf32>
    %10 = arith.addf %9, %5 : vector<8x256xf32>
    %c0_13 = arith.constant 0 : index
    %c0_14 = arith.constant 0 : index
    %11 = vector.load %arg7[%c0_13, %c0_14] : memref<8x1xf32, #tpu.memory_space<vmem>>, vector<8x1xf32>
    %12 = vector.broadcast %11 : vector<8x1xf32> to vector<8x256xf32>
    %13 = arith.addf %10, %12 : vector<8x256xf32>
    %cst_15 = arith.constant 0.000000e+00 : f32
    %14 = vector.broadcast %cst_15 : f32 to vector<8x256xf32>
    %15 = arith.maximumf %13, %14 : vector<8x256xf32>
    %c0_16 = arith.constant 0 : index
    %c0_17 = arith.constant 0 : index
    %c0_18 = arith.constant 0 : index
    %16 = vector.load %arg8[%c0_16, %c0_17, %c0_18] : memref<1x8x256xf32, #tpu.memory_space<vmem>>, vector<1x8x256xf32>
    %17 = vector.shape_cast %16 : vector<1x8x256xf32> to vector<8x256xf32>
    %18 = vector.shape_cast %15 : vector<8x256xf32> to vector<1x8x256xf32>
    tpu.vector_store %arg8[%c0_16, %c0_17, %c0_18], %18 {strides = array<i32>} : memref<1x8x256xf32, #tpu.memory_space<vmem>>, vector<1x8x256xf32>,
    return
  }
  func.func @transform_0(%arg0: i32, %arg1: i32) -> (i32, i32, i32) {
    %c0_i32 = arith.constant 0 : i32
    %c0_i32_0 = arith.constant 0 : i32
    return %arg1, %c0_i32, %arg0 : i32, i32, i32
  }
  func.func @transform_1(%arg0: i32, %arg1: i32) -> (i32, i32, i32) {
    %c0_i32 = arith.constant 0 : i32
    %c0_i32_0 = arith.constant 0 : i32
    %c0_i32_1 = arith.constant 0 : i32
    return %arg1, %c0_i32, %c0_i32_0 : i32, i32, i32
  }
  func.func @transform_2(%arg0: i32, %arg1: i32) -> (i32, i32) {
    %c0_i32 = arith.constant 0 : i32
    %c0_i32_0 = arith.constant 0 : i32
    return %c0_i32, %arg0 : i32, i32
  }
  func.func @transform_3(%arg0: i32, %arg1: i32) -> (i32, i32) {
    %c0_i32 = arith.constant 0 : i32
    %c0_i32_0 = arith.constant 0 : i32
    %c0_i32_1 = arith.constant 0 : i32
    return %c0_i32, %c0_i32_0 : i32, i32
  }
  func.func @transform_4(%arg0: i32, %arg1: i32) -> (i32, i32) {
    %c0_i32 = arith.constant 0 : i32
    %c0_i32_0 = arith.constant 0 : i32
    %c0_i32_1 = arith.constant 0 : i32
    return %c0_i32, %c0_i32_0 : i32, i32
  }
  func.func @transform_5(%arg0: i32, %arg1: i32) -> (i32, i32) {
    %c0_i32 = arith.constant 0 : i32
    %c0_i32_0 = arith.constant 0 : i32
    %c0_i32_1 = arith.constant 0 : i32
    return %c0_i32, %c0_i32_0 : i32, i32
  }
  func.func @transform_6(%arg0: i32, %arg1: i32) -> (i32, i32, i32) {
    %c0_i32 = arith.constant 0 : i32
    %c0_i32_0 = arith.constant 0 : i32
    return %arg1, %c0_i32, %arg0 : i32, i32, i32
  }
}

</mosaic_0001>

<llo_original>
// kernel: tpu_custom_call.1
$region0: #{tpu_custom_call.1}
  #allocation0 [shape = 'u32[]', space=smem, size = 0x4, offset = 0x4, fixed_abs, tag = 'smem constant byte address 0x4 - core index']
  #allocation1 [shape = 'u32[144,128]{1,0:T(1,128)}', space=vmem, size = 0x12000, scoped, tag = 'internal scratch']
  %s0 = inlined_call_operand.vmem [shape: f32[2,4,256], index: 0, kind: input, shape index: {}]
  %s1 = inlined_call_operand.vmem [shape: f32[2,4,64], index: 1, kind: input, shape index: {}]
  %s2 = inlined_call_operand.hbm [shape: f32[64,256], index: 2, kind: input, shape index: {}]
  %s3 = inlined_call_operand.vmem [shape: f32[8,4], index: 3, kind: input, shape index: {}]
  %s4 = inlined_call_operand.vmem [shape: f32[8,4], index: 4, kind: input, shape index: {}]
  %s5 = inlined_call_operand.vmem [shape: f32[8,1], index: 5, kind: input, shape index: {}]
  %s6 = inlined_call_operand.hbm [shape: f32[2,8,256], index: 6, kind: output, shape index: {}]
  %s7 = sld [smem:[#allocation0]]
  $region61: #{tpu_custom_call.1} parent=0
    _
  %s9 = ssub.s32 1, %s7
  %s10 = scalar_select 0, %s9, %s7
  $region1: #{tpu_custom_call.1} parent=0
    #allocation2 [shape = 'u8[65536]{0}', space=vmem, size = 0x10000, scoped, tag = 'input window, operand 2, single buffered']
    #allocation3 [shape = 's32[2]{0}', space=sflag, size = 0x8, scoped, tag = 'scoped memory for tpu_custom_call.1']
    #allocation4 [shape = 's32[2]{0}', space=sflag, size = 0x8, scoped, tag = 'scoped memory for tpu_custom_call.1']
    #allocation5 [shape = 'u8[16384]{0}', space=vmem, size = 0x4000, scoped, tag = 'output window, operand 0']
    %11 = vsyncpa [#allocation3], 0
    %12 = vsyncpa [#allocation4], 0
    %s13 = scalar_lea.sflag [#allocation4], 1
    %14 = vsyncpa %s13, 0
    loop: start=0, step=1, limit=4
    $region2: #{tpu_custom_call.1} parent=1 // loop_pre_header
      _
    $region3: #{tpu_custom_call.1} parent=1 // loop_header
      %s16 = sphi 0, %s20
      %p17 = scmp.ge.s32.totalorder %s16, 4
      %s23 = sphi 0, %s35
      %s24 = sphi 0, %s31
      %s25 = sphi 0, %s23
      %s26 = sphi 0, %s24
      %s27 = sphi 0, %s25
      %s28 = sphi 0, %s26
      %s40 = sphi 0, %s42
      %s43 = sphi 0, %s40
      %s44 = sphi 0, %s43
      %s60 = sphi 0, %s44
      %s66 = sphi 0, %s68
      %s69 = sphi 0, %s66
      %s70 = sphi 0, %s69
      %s86 = sphi 0, %s70
      %s92 = sphi 0, %s94
      %s95 = sphi 0, %s92
      %s96 = sphi 0, %s95
      %s112 = sphi 0, %s96
      %s116 = sphi 0, %s116
      %s118 = sphi 0, %s116
      %s119 = sphi 0, %s118
      %s133 = sphi 0, %s119
      %s137 = sphi 0, %s137
      %s139 = sphi 0, %s137
      %s140 = sphi 0, %s139
      %s154 = sphi 0, %s140
      %s158 = sphi 0, %s158
      %s160 = sphi 0, %s158
      %s161 = sphi 0, %s160
      %s175 = sphi 0, %s161
      %s183 = sphi 0, %s185
      %s186 = sphi 0, %s183
      %s187 = sphi 0, %s186
      %s203 = sphi 0, %s187
    $region4: #{tpu_custom_call.1} parent=1 // loop_header_branch
      %19 = sbr.rel (%p17) target = $region8
    $region5: #{tpu_custom_call.1} parent=1 // loop_body
      %s21 = ssub.s32 %s16, 1
      %s22 = ssub.s32 %s16, 2
      %s29 = sadd.s32 1, %s24
      %p30 = scmp.ge.s32.totalorder %s29, 2
      %s31 = scalar_select %p30, 0, %s29
      %s32 = sadd.s32 1, %s23
      %s33 = scalar_select %p30, %s32, %s23
      %p34 = scmp.ge.s32.totalorder %s33, 1
      %s35 = scalar_select %p34, 0, %s33
      %s36 = ssub.s32 %s24, %s31
      %s37 = ssub.s32 %s23, %s35
      %s38 = sor.u32 %s36, %s37
      %p39 = scmp.eq.s32.totalorder %s38, 0
      %s41 = sadd.s32 %s40, 1
      %s42 = scalar_select %p39, %s40, %s41
      %p45 = pneg %p39
      %p46 = scmp.eq.s32.totalorder %s16, 1
      %p47 = por %p45, %p46
      %p48 = scmp.ne.s32.totalorder %s40, %s43
      %p49 = scmp.eq.s32.totalorder %s16, 0
      %p50 = por %p48, %p49
      %p51 = scmp.ne.s32.totalorder %s40, %s43
      %p52 = scmp.eq.s32.totalorder %s21, 1
      %p53 = por %p51, %p52
      %p54 = scmp.ne.s32.totalorder %s43, %s44
      %p55 = scmp.eq.s32.totalorder %s21, 0
      %p56 = por %p54, %p55
      %p57 = scmp.ne.s32.totalorder %s43, %s44
      %p58 = scmp.eq.s32.totalorder %s22, 1
      %p59 = por %p57, %p58
      %p61 = scmp.ne.s32.totalorder %s44, %s60
      %p62 = scmp.eq.s32.totalorder %s22, 0
      %p63 = por %p61, %p62
      %s64 = ssub.s32 %s24, %s31
      %p65 = scmp.eq.s32.totalorder %s64, 0
      %s67 = sadd.s32 %s66, 1
      %s68 = scalar_select %p65, %s66, %s67
      %p71 = pneg %p65
      %p72 = scmp.eq.s32.totalorder %s16, 1
      %p73 = por %p71, %p72
      %p74 = scmp.ne.s32.totalorder %s66, %s69
      %p75 = scmp.eq.s32.totalorder %s16, 0
      %p76 = por %p74, %p75
      %p77 = scmp.ne.s32.totalorder %s66, %s69
      %p78 = scmp.eq.s32.totalorder %s21, 1
      %p79 = por %p77, %p78
      %p80 = scmp.ne.s32.totalorder %s69, %s70
      %p81 = scmp.eq.s32.totalorder %s21, 0
      %p82 = por %p80, %p81
      %p83 = scmp.ne.s32.totalorder %s69, %s70
      %p84 = scmp.eq.s32.totalorder %s22, 1
      %p85 = por %p83, %p84
      %p87 = scmp.ne.s32.totalorder %s70, %s86
      %p88 = scmp.eq.s32.totalorder %s22, 0
      %p89 = por %p87, %p88
      %s90 = ssub.s32 %s23, %s35
      %p91 = scmp.eq.s32.totalorder %s90, 0
      %s93 = sadd.s32 %s92, 1
      %s94 = scalar_select %p91, %s92, %s93
      %p97 = pneg %p91
      %p98 = scmp.eq.s32.totalorder %s16, 1
      %p99 = por %p97, %p98
      %p100 = scmp.ne.s32.totalorder %s92, %s95
      %p101 = scmp.eq.s32.totalorder %s16, 0
      %p102 = por %p100, %p101
      %p103 = scmp.ne.s32.totalorder %s92, %s95
      %p104 = scmp.eq.s32.totalorder %s21, 1
      %p105 = por %p103, %p104
      %p106 = scmp.ne.s32.totalorder %s95, %s96
      %p107 = scmp.eq.s32.totalorder %s21, 0
      %p108 = por %p106, %p107
      %p109 = scmp.ne.s32.totalorder %s95, %s96
      %p110 = scmp.eq.s32.totalorder %s22, 1
      %p111 = por %p109, %p110
      %p113 = scmp.ne.s32.totalorder %s96, %s112
      %p114 = scmp.eq.s32.totalorder %s22, 0
      %p115 = por %p113, %p114
      %s117 = sadd.s32 %s116, 1
      %p120 = scmp.eq.s32.totalorder %s16, 1
      %p121 = scmp.ne.s32.totalorder %s116, %s118
      %p122 = scmp.eq.s32.totalorder %s16, 0
      %p123 = por %p121, %p122
      %p124 = scmp.ne.s32.totalorder %s116, %s118
      %p125 = scmp.eq.s32.totalorder %s21, 1
      %p126 = por %p124, %p125
      %p127 = scmp.ne.s32.totalorder %s118, %s119
      %p128 = scmp.eq.s32.totalorder %s21, 0
      %p129 = por %p127, %p128
      %p130 = scmp.ne.s32.totalorder %s118, %s119
      %p131 = scmp.eq.s32.totalorder %s22, 1
      %p132 = por %p130, %p131
      %p134 = scmp.ne.s32.totalorder %s119, %s133
      %p135 = scmp.eq.s32.totalorder %s22, 0
      %p136 = por %p134, %p135
      %s138 = sadd.s32 %s137, 1
      %p141 = scmp.eq.s32.totalorder %s16, 1
      %p142 = scmp.ne.s32.totalorder %s137, %s139
      %p143 = scmp.eq.s32.totalorder %s16, 0
      %p144 = por %p142, %p143
      %p145 = scmp.ne.s32.totalorder %s137, %s139
      %p146 = scmp.eq.s32.totalorder %s21, 1
      %p147 = por %p145, %p146
      %p148 = scmp.ne.s32.totalorder %s139, %s140
      %p149 = scmp.eq.s32.totalorder %s21, 0
      %p150 = por %p148, %p149
      %p151 = scmp.ne.s32.totalorder %s139, %s140
      %p152 = scmp.eq.s32.totalorder %s22, 1
      %p153 = por %p151, %p152
      %p155 = scmp.ne.s32.totalorder %s140, %s154
      %p156 = scmp.eq.s32.totalorder %s22, 0
      %p157 = por %p155, %p156
      %s159 = sadd.s32 %s158, 1
      %p162 = scmp.eq.s32.totalorder %s16, 1
      %p163 = scmp.ne.s32.totalorder %s158, %s160
      %p164 = scmp.eq.s32.totalorder %s16, 0
      %p165 = por %p163, %p164
      %p166 = scmp.ne.s32.totalorder %s158, %s160
      %p167 = scmp.eq.s32.totalorder %s21, 1
      %p168 = por %p166, %p167
      %p169 = scmp.ne.s32.totalorder %s160, %s161
      %p170 = scmp.eq.s32.totalorder %s21, 0
      %p171 = por %p169, %p170
      %p172 = scmp.ne.s32.totalorder %s160, %s161
      %p173 = scmp.eq.s32.totalorder %s22, 1
      %p174 = por %p172, %p173
      %p176 = scmp.ne.s32.totalorder %s161, %s175
      %p177 = scmp.eq.s32.totalorder %s22, 0
      %p178 = por %p176, %p177
      %s179 = ssub.s32 %s24, %s31
      %s180 = ssub.s32 %s23, %s35
      %s181 = sor.u32 %s179, %s180
      %p182 = scmp.eq.s32.totalorder %s181, 0
      %s184 = sadd.s32 %s183, 1
      %s185 = scalar_select %p182, %s183, %s184
      %p188 = pneg %p182
      %p189 = scmp.eq.s32.totalorder %s16, 1
      %p190 = por %p188, %p189
      %p191 = scmp.ne.s32.totalorder %s183, %s186
      %p192 = scmp.eq.s32.totalorder %s16, 0
      %p193 = por %p191, %p192
      %p194 = scmp.ne.s32.totalorder %s183, %s186
      %p195 = scmp.eq.s32.totalorder %s21, 1
      %p196 = por %p194, %p195
      %p197 = scmp.ne.s32.totalorder %s186, %s187
      %p198 = scmp.eq.s32.totalorder %s21, 0
      %p199 = por %p197, %p198
      %p200 = scmp.ne.s32.totalorder %s186, %s187
      %p201 = scmp.eq.s32.totalorder %s22, 1
      %p202 = por %p200, %p201
      %p204 = scmp.ne.s32.totalorder %s187, %s203
      %p205 = scmp.eq.s32.totalorder %s22, 0
      %p206 = por %p204, %p205
      %p207 = scmp.le.s32.totalorder 1, %s16
      %p208 = scmp.lt.s32.totalorder %s16, 3
      %p209 = pnand %p207, %p208
      %p210 = pneg %p209
      // Predicated region
      $region9: #{tpu_custom_call.1} parent=5 // pred_check
        _
      $region10: #{tpu_custom_call.1} parent=5 // pred_check_branch
        %212 = sbr.rel (%p209) target = $region12
      $region11: #{tpu_custom_call.1} parent=5 // pred_region
        %s213 = ssub.s32 %s16, 1
        // Predicated region
        $region13: #{tpu_custom_call.1} parent=11 // pred_check
          %p214 = pneg %p108
        $region14: #{tpu_custom_call.1} parent=11 // pred_check_branch
          %216 = sbr.rel (%p214) target = $region16
        $region15: #{tpu_custom_call.1} parent=11 // pred_region
          %s217 = smul.u32 2, %s25
          %s219 = ssub.s32 2048, 2048
          %220 = vsyncadd [#allocation3], %s219
          %s221 = smul.addr %s217, 128
          %s222 = scalar_lea.hbm %s2, %s221
          %s223 = sshll.u32 [#allocation2], 4
          %s224 = int_to_ptr.vmem [resolvable:$true] %s223
          %229 = dma.hbm_to_vmem [thread:$0]  %s222, 2048, %s224, [#allocation3], 256, 256, 16
        $region16: #{tpu_custom_call.1} parent=11 // pred_fallthru
          _
        // Predicated region
        $region17: #{tpu_custom_call.1} parent=11 // pred_check
          %p230 = pneg %p129
        $region18: #{tpu_custom_call.1} parent=11 // pred_check_branch
          %232 = sbr.rel (%p230) target = $region20
        $region19: #{tpu_custom_call.1} parent=11 // pred_region
          _
        $region20: #{tpu_custom_call.1} parent=11 // pred_fallthru
          _
        // Predicated region
        $region21: #{tpu_custom_call.1} parent=11 // pred_check
          %p233 = pneg %p150
        $region22: #{tpu_custom_call.1} parent=11 // pred_check_branch
          %235 = sbr.rel (%p233) target = $region24
        $region23: #{tpu_custom_call.1} parent=11 // pred_region
          _
        $region24: #{tpu_custom_call.1} parent=11 // pred_fallthru
          _
        // Predicated region
        $region25: #{tpu_custom_call.1} parent=11 // pred_check
          %p236 = pneg %p171
        $region26: #{tpu_custom_call.1} parent=11 // pred_check_branch
          %238 = sbr.rel (%p236) target = $region28
        $region27: #{tpu_custom_call.1} parent=11 // pred_region
          _
        $region28: #{tpu_custom_call.1} parent=11 // pred_fallthru
          _
      $region12: #{tpu_custom_call.1} parent=5 // pred_fallthru
        _
      %p239 = scmp.lt.s32.totalorder %s16, 2
      // Predicated region
      $region29: #{tpu_custom_call.1} parent=5 // pred_check
        %p240 = pneg %p239
      $region30: #{tpu_custom_call.1} parent=5 // pred_check_branch
        %242 = sbr.rel (%p240) target = $region32
      $region31: #{tpu_custom_call.1} parent=5 // pred_region
        // Predicated region
        $region33: #{tpu_custom_call.1} parent=31 // pred_check
          %p243 = pneg %p50
        $region34: #{tpu_custom_call.1} parent=31 // pred_check_branch
          %245 = sbr.rel (%p243) target = $region36
        $region35: #{tpu_custom_call.1} parent=31 // pred_region
          %s246 = smul.u32 2, %s23
          %p247 = scmp.lt.s32.totalorder %s24, 1
          %s248 = scalar_select %p247, %s24, 1
          %p249 = scmp.lt.s32.totalorder %s246, 1
          %s250 = scalar_select %p249, %s246, 1
          %s251 = smul.addr %s248, 2
          %s252 = sadd.s32 %s250, %s251
          %s253 = smul.addr %s252, 4
          %s254 = scalar_lea.vmem %s0, %s253
          %s255 = smul.u32 2, %s23
        $region36: #{tpu_custom_call.1} parent=31 // pred_fallthru
          _
        // Predicated region
        $region37: #{tpu_custom_call.1} parent=31 // pred_check
          %p256 = pneg %p76
        $region38: #{tpu_custom_call.1} parent=31 // pred_check_branch
          %258 = sbr.rel (%p256) target = $region40
        $region39: #{tpu_custom_call.1} parent=31 // pred_region
          %p259 = scmp.lt.s32.totalorder %s24, 1
          %s260 = scalar_select %p259, %s24, 1
          %s261 = smul.addr %s260, 4
          %s262 = scalar_lea.vmem %s1, %s261
        $region40: #{tpu_custom_call.1} parent=31 // pred_fallthru
          _
      $region32: #{tpu_custom_call.1} parent=5 // pred_fallthru
        _
      %p263 = scmp.le.s32.totalorder 1, %s16
      %p264 = scmp.lt.s32.totalorder %s16, 3
      %p265 = pnand %p263, %p264
      %p266 = pneg %p265
      // Predicated region
      $region41: #{tpu_custom_call.1} parent=5 // pred_check
        _
      $region42: #{tpu_custom_call.1} parent=5 // pred_check_branch
        %268 = sbr.rel (%p265) target = $region44
      $region43: #{tpu_custom_call.1} parent=5 // pred_region
        %s269 = ssub.s32 %s16, 1
        // Predicated region
        $region45: #{tpu_custom_call.1} parent=43 // pred_check
          %p270 = pneg %p108
        $region46: #{tpu_custom_call.1} parent=43 // pred_check_branch
          %272 = sbr.rel (%p270) target = $region48
        $region47: #{tpu_custom_call.1} parent=43 // pred_region
          %273 = dma.done [#allocation3], 2048
        $region48: #{tpu_custom_call.1} parent=43 // pred_fallthru
          _
        %s274 = smul.u32 2, %s25
        %p275 = scmp.lt.s32.totalorder %s26, 1
        %s276 = scalar_select %p275, %s26, 1
        %p277 = scmp.lt.s32.totalorder %s274, 1
        %s278 = scalar_select %p277, %s274, 1
        %s279 = smul.addr %s276, 2
        %s280 = sadd.s32 %s278, %s279
        %s281 = smul.addr %s280, 4
        %s282 = scalar_lea.vmem %s0, %s281
        %p283 = pneg %p56
        %p284 = pneg %p53
        %p285 = scmp.lt.s32.totalorder %s26, 1
        %s286 = scalar_select %p285, %s26, 1
        %s287 = smul.addr %s286, 4
        %s288 = scalar_lea.vmem %s1, %s287
        %p289 = pneg %p82
        %p290 = pneg %p79
        %p291 = pneg %p108
        %p292 = pneg %p105
        %p293 = pneg %p129
        %p294 = pneg %p126
        %p295 = pneg %p150
        %p296 = pneg %p147
        %p297 = pneg %p171
        %p298 = pneg %p168
        %p299 = pneg %p199
        %p300 = pneg %p196
        %s301 = sand.u32 %s186, 1
        %s302 = scalar_lea.sflag [#allocation4], %s301
        %s303 = sand.u32 %s186, 1
        %s304 = smul.addr %s303, 16
        %s305 = scalar_lea.vmem [#allocation5], %s304
        %s306 = smul.u32 2, %s25
        %p307 = scmp.lt.s32.totalorder %s26, 1
        %s308 = scalar_select %p307, %s26, 1
        %p309 = scmp.lt.s32.totalorder %s306, 1
        %s310 = scalar_select %p309, %s306, 1
        %s311 = smul.addr %s308, 2
        %s312 = sadd.s32 %s310, %s311
        %s313 = smul.addr %s312, 4
        %s314 = scalar_lea.vmem %s0, %s313
        %s315 = smul.u32 2, %s25
        %p316 = scmp.lt.s32.totalorder %s26, 1
        %s317 = scalar_select %p316, %s26, 1
        %s318 = smul.addr %s317, 4
        %s319 = scalar_lea.vmem %s1, %s318
        %s320 = smul.u32 2, %s25
        %s321 = smul.u32 2, %s25
        %v322 = vld [vmem:[%s4] sm:$0xff]
        %v323 = vld [vmem:[%s319] sm:$0xf]
        %vm324 = vcmask 31744
        %v326 = vsel %vm324, %v322, 0
        %vm328 = vcmask 1043456
        %v330 = vsel %vm328, %v323, 0
        %332 = vmatprep.subr.mxu0 0.0
        %333 = vmatpush1.msra.mxu0 %v330
        %334 = vmatprep.subr.mxu0 0.0
        %335 = vmatpush1.msra.mxu0 0.0
        %336 = vmatprep.subr.mxu0 0.0
        %337 = vmatpush1.msra.mxu0 0.0
        %338 = vmatprep.subr.mxu0 0.0
        %339 = vmatpush1.msra.mxu0 0.0
        %340 = vmatprep.subr.mxu0 0.0
        %341 = vmatpush1.msra.mxu0 0.0
        %342 = vmatprep.subr.mxu0 0.0
        %343 = vmatpush1.msra.mxu0 0.0
        %344 = vmatprep.subr.mxu0 0.0
        %345 = vmatpush1.msra.mxu0 0.0
        %346 = vmatprep.subr.mxu0 0.0
        %347 = vmatpush1.msra.mxu0 0.0
        %348 = vmatprep.subr.mxu0 0.0
        %349 = vmatpush1.msra.mxu0 0.0
        %350 = vmatprep.subr.mxu0 0.0
        %351 = vmatpush1.msra.mxu0 0.0
        %352 = vmatprep.subr.mxu0 0.0
        %353 = vmatpush1.msra.mxu0 0.0
        %354 = vmatprep.subr.mxu0 0.0
        %355 = vmatpush1.msra.mxu0 0.0
        %356 = vmatprep.subr.mxu0 0.0
        %357 = vmatpush1.msra.mxu0 0.0
        %358 = vmatprep.subr.mxu0 0.0
        %359 = vmatpush1.msra.mxu0 0.0
        %360 = vmatprep.subr.mxu0 0.0
        %361 = vmatpush1.msra.mxu0 0.0
        %362 = vmatprep.subr.mxu0 0.0
        %363 = vmatpush1.msra.mxu0 0.0
        %364 = vmatprep.subr.mxu0 0.0
        %365 = vmatpush1.msra.mxu0 0.0
        %366 = vmatprep.subr.mxu0 0.0
        %367 = vmatpush1.msra.mxu0 0.0
        %368 = vmatprep.subr.mxu0 0.0
        %369 = vmatpush1.msra.mxu0 0.0
        %370 = vmatprep.subr.mxu0 0.0
        %371 = vmatpush1.msra.mxu0 0.0
        %372 = vmatprep.subr.mxu0 0.0
        %373 = vmatpush1.msra.mxu0 0.0
        %374 = vmatprep.subr.mxu0 0.0
        %375 = vmatpush1.msra.mxu0 0.0
        %376 = vmatprep.subr.mxu0 0.0
        %377 = vmatpush1.msra.mxu0 0.0
        %378 = vmatprep.subr.mxu0 0.0
        %379 = vmatpush1.msra.mxu0 0.0
        %380 = vmatprep.subr.mxu0 0.0
        %381 = vmatpush1.msra.mxu0 0.0
        %382 = vmatprep.subr.mxu0 0.0
        %383 = vmatpush1.msra.mxu0 0.0
        %384 = vmatprep.subr.mxu0 0.0
        %385 = vmatpush1.msra.mxu0 0.0
        %386 = vmatprep.subr.mxu0 0.0
        %387 = vmatpush1.msra.mxu0 0.0
        %388 = vmatprep.subr.mxu0 0.0
        %389 = vmatpush1.msra.mxu0 0.0
        %390 = vmatprep.subr.mxu0 0.0
        %391 = vmatpush1.msra.mxu0 0.0
        %392 = vmatprep.subr.mxu0 0.0
        %393 = vmatpush1.msra.mxu0 0.0
        %394 = vmatprep.subr.mxu0 0.0
        %395 = vmatpush1.msra.mxu0 0.0
        %396 = vmatprep.mubr.f32.mxu0 0.0
        %397 = vmatmul.mubr.f32.gmra.mrb[0].mxu0 %v326
        %v398 = vpop.f32.mrb[0].mxu0
        %v399 = vadd.f32 0.0, %v398
        %v400 = vpop.f32.mrb[0].mxu0
        %401 = vdwg.mxu0
        %v402 = vld [vmem:[#allocation2] sm:$0xff]
        %v403 = vld [vmem:[#allocation2 + $0x8] sm:$0xff]
        %v404 = vld [vmem:[#allocation2 + $0x10] sm:$0xff]
        %v405 = vld [vmem:[#allocation2 + $0x18] sm:$0xff]
        %v406 = vld [vmem:[#allocation2 + $0x20] sm:$0xff]
        %v407 = vld [vmem:[#allocation2 + $0x28] sm:$0xff]
        %v408 = vld [vmem:[#allocation2 + $0x30] sm:$0xff]
        %v409 = vld [vmem:[#allocation2 + $0x38] sm:$0xff]
        %v410 = vld [vmem:[#allocation2 + $0x40] sm:$0xff]
        %v411 = vld [vmem:[#allocation2 + $0x48] sm:$0xff]
        %v412 = vld [vmem:[#allocation2 + $0x50] sm:$0xff]
        %v413 = vld [vmem:[#allocation2 + $0x58] sm:$0xff]
        %v414 = vld [vmem:[#allocation2 + $0x60] sm:$0xff]
        %v415 = vld [vmem:[#allocation2 + $0x68] sm:$0xff]
        %v416 = vld [vmem:[#allocation2 + $0x70] sm:$0xff]
        %v417 = vld [vmem:[#allocation2 + $0x78] sm:$0xff]
        %vm418 = vcmask 523264
        %v420 = vsel %vm418, %v399, 0
        %422 = vmatprep.subr.mxu0 %v403
        %423 = vmatpush1.msra.mxu0 %v402
        %424 = vmatprep.subr.mxu0 %v405
        %425 = vmatpush1.msra.mxu0 %v404
        %426 = vmatprep.subr.mxu0 %v407
        %427 = vmatpush1.msra.mxu0 %v406
        %428 = vmatprep.subr.mxu0 %v409
        %429 = vmatpush1.msra.mxu0 %v408
        %430 = vmatprep.subr.mxu0 %v411
        %431 = vmatpush1.msra.mxu0 %v410
        %432 = vmatprep.subr.mxu0 %v413
        %433 = vmatpush1.msra.mxu0 %v412
        %434 = vmatprep.subr.mxu0 %v415
        %435 = vmatpush1.msra.mxu0 %v414
        %436 = vmatprep.subr.mxu0 %v417
        %437 = vmatpush1.msra.mxu0 %v416
        %438 = vmatprep.subr.mxu0 0.0
        %439 = vmatpush1.msra.mxu0 0.0
        %440 = vmatprep.subr.mxu0 0.0
        %441 = vmatpush1.msra.mxu0 0.0
        %442 = vmatprep.subr.mxu0 0.0
        %443 = vmatpush1.msra.mxu0 0.0
        %444 = vmatprep.subr.mxu0 0.0
        %445 = vmatpush1.msra.mxu0 0.0
        %446 = vmatprep.subr.mxu0 0.0
        %447 = vmatpush1.msra.mxu0 0.0
        %448 = vmatprep.subr.mxu0 0.0
        %449 = vmatpush1.msra.mxu0 0.0
        %450 = vmatprep.subr.mxu0 0.0
        %451 = vmatpush1.msra.mxu0 0.0
        %452 = vmatprep.subr.mxu0 0.0
        %453 = vmatpush1.msra.mxu0 0.0
        %454 = vmatprep.subr.mxu0 0.0
        %455 = vmatpush1.msra.mxu0 0.0
        %456 = vmatprep.subr.mxu0 0.0
        %457 = vmatpush1.msra.mxu0 0.0
        %458 = vmatprep.subr.mxu0 0.0
        %459 = vmatpush1.msra.mxu0 0.0
        %460 = vmatprep.subr.mxu0 0.0
        %461 = vmatpush1.msra.mxu0 0.0
        %462 = vmatprep.subr.mxu0 0.0
        %463 = vmatpush1.msra.mxu0 0.0
        %464 = vmatprep.subr.mxu0 0.0
        %465 = vmatpush1.msra.mxu0 0.0
        %466 = vmatprep.subr.mxu0 0.0
        %467 = vmatpush1.msra.mxu0 0.0
        %468 = vmatprep.subr.mxu0 0.0
        %469 = vmatpush1.msra.mxu0 0.0
        %470 = vmatprep.subr.mxu0 0.0
        %471 = vmatpush1.msra.mxu0 0.0
        %472 = vmatprep.subr.mxu0 0.0
        %473 = vmatpush1.msra.mxu0 0.0
        %474 = vmatprep.subr.mxu0 0.0
        %475 = vmatpush1.msra.mxu0 0.0
        %476 = vmatprep.subr.mxu0 0.0
        %477 = vmatpush1.msra.mxu0 0.0
        %478 = vmatprep.subr.mxu0 0.0
        %479 = vmatpush1.msra.mxu0 0.0
        %480 = vmatprep.subr.mxu0 0.0
        %481 = vmatpush1.msra.mxu0 0.0
        %482 = vmatprep.subr.mxu0 0.0
        %483 = vmatpush1.msra.mxu0 0.0
        %484 = vmatprep.subr.mxu0 0.0
        %485 = vmatpush1.msra.mxu0 0.0
        %486 = vmatprep.mubr.f32.mxu0 0.0
        %487 = vmatmul.mubr.f32.gmra.mrb[0].mxu0 %v420
        %v488 = vpop.f32.mrb[0].mxu0
        %v489 = vadd.f32 0.0, %v488
        %v490 = vpop.f32.mrb[0].mxu0
        %v491 = vadd.f32 0.0, %v490
        %492 = vdwg.mxu0
        %v493 = vld [vmem:[%s3] sm:$0xff]
        %v494 = vld [vmem:[%s314] sm:$0xff]
        %v496 = vcombine.high %v494, %v494
        %v498 = vsel %vm324, %v493, 0
        %v500 = vsel %vm328, %v494, 0
        %v502 = vsel %vm328, %v496, 0
        %504 = vmatprep.subr.mxu0 %v502
        %505 = vmatpush1.msra.mxu0 %v500
        %506 = vmatprep.subr.mxu0 0.0
        %507 = vmatpush1.msra.mxu0 0.0
        %508 = vmatprep.subr.mxu0 0.0
        %509 = vmatpush1.msra.mxu0 0.0
        %510 = vmatprep.subr.mxu0 0.0
        %511 = vmatpush1.msra.mxu0 0.0
        %512 = vmatprep.subr.mxu0 0.0
        %513 = vmatpush1.msra.mxu0 0.0
        %514 = vmatprep.subr.mxu0 0.0
        %515 = vmatpush1.msra.mxu0 0.0
        %516 = vmatprep.subr.mxu0 0.0
        %517 = vmatpush1.msra.mxu0 0.0
        %518 = vmatprep.subr.mxu0 0.0
        %519 = vmatpush1.msra.mxu0 0.0
        %520 = vmatprep.subr.mxu0 0.0
        %521 = vmatpush1.msra.mxu0 0.0
        %522 = vmatprep.subr.mxu0 0.0
        %523 = vmatpush1.msra.mxu0 0.0
        %524 = vmatprep.subr.mxu0 0.0
        %525 = vmatpush1.msra.mxu0 0.0
        %526 = vmatprep.subr.mxu0 0.0
        %527 = vmatpush1.msra.mxu0 0.0
        %528 = vmatprep.subr.mxu0 0.0
        %529 = vmatpush1.msra.mxu0 0.0
        %530 = vmatprep.subr.mxu0 0.0
        %531 = vmatpush1.msra.mxu0 0.0
        %532 = vmatprep.subr.mxu0 0.0
        %533 = vmatpush1.msra.mxu0 0.0
        %534 = vmatprep.subr.mxu0 0.0
        %535 = vmatpush1.msra.mxu0 0.0
        %536 = vmatprep.subr.mxu0 0.0
        %537 = vmatpush1.msra.mxu0 0.0
        %538 = vmatprep.subr.mxu0 0.0
        %539 = vmatpush1.msra.mxu0 0.0
        %540 = vmatprep.subr.mxu0 0.0
        %541 = vmatpush1.msra.mxu0 0.0
        %542 = vmatprep.subr.mxu0 0.0
        %543 = vmatpush1.msra.mxu0 0.0
        %544 = vmatprep.subr.mxu0 0.0
        %545 = vmatpush1.msra.mxu0 0.0
        %546 = vmatprep.subr.mxu0 0.0
        %547 = vmatpush1.msra.mxu0 0.0
        %548 = vmatprep.subr.mxu0 0.0
        %549 = vmatpush1.msra.mxu0 0.0
        %550 = vmatprep.subr.mxu0 0.0
        %551 = vmatpush1.msra.mxu0 0.0
        %552 = vmatprep.subr.mxu0 0.0
        %553 = vmatpush1.msra.mxu0 0.0
        %554 = vmatprep.subr.mxu0 0.0
        %555 = vmatpush1.msra.mxu0 0.0
        %556 = vmatprep.subr.mxu0 0.0
        %557 = vmatpush1.msra.mxu0 0.0
        %558 = vmatprep.subr.mxu0 0.0
        %559 = vmatpush1.msra.mxu0 0.0
        %560 = vmatprep.subr.mxu0 0.0
        %561 = vmatpush1.msra.mxu0 0.0
        %562 = vmatprep.subr.mxu0 0.0
        %563 = vmatpush1.msra.mxu0 0.0
        %564 = vmatprep.subr.mxu0 0.0
        %565 = vmatpush1.msra.mxu0 0.0
        %566 = vmatprep.subr.mxu0 0.0
        %567 = vmatpush1.msra.mxu0 0.0
        %568 = vmatprep.mubr.f32.mxu0 0.0
        %569 = vmatmul.mubr.f32.gmra.mrb[0].mxu0 %v498
        %v570 = vpop.f32.mrb[0].mxu0
        %v571 = vadd.f32 %v489, %v570
        %v572 = vpop.f32.mrb[0].mxu0
        %v573 = vadd.f32 %v491, %v572
        %574 = vdwg.mxu0
        %v575 = vld [vmem:[%s5] sm:$0xff]
        %577 = vset.pattern.permute.xlu0 0
        %578 = vperm.xlu0 %577, %v575
        %v579 = vpop.permute.xlu0 %578
        %v581 = vadd.f32 %v571, %v579
        %v582 = vadd.f32 %v573, %v579
        %v583 = vmax.f32 %v581, 0.0
        %v584 = vmax.f32 %v582, 0.0
        %585 = vst [vmem:[%s305] sm:$0xff] %v583
        %586 = vst [vmem:[%s305 + $0x8] sm:$0xff] %v584
        %s587 = sand.u32 %s186, 1
        %s588 = scalar_lea.sflag [#allocation4], %s587
        %s589 = sand.u32 %s186, 1
        %s590 = smul.addr %s589, 16
        %s591 = scalar_lea.vmem [#allocation5], %s590
        // Predicated region
        $region49: #{tpu_custom_call.1} parent=43 // pred_check
          %p592 = pneg %p196
        $region50: #{tpu_custom_call.1} parent=43 // pred_check_branch
          %594 = sbr.rel (%p592) target = $region52
        $region51: #{tpu_custom_call.1} parent=43 // pred_region
          %s595 = smul.u32 2, %s25
          %s597 = ssub.s32 256, 256
          %598 = vsyncadd %s588, %s597
          %s599 = smul.addr %s26, 2
          %s600 = sadd.s32 %s595, %s599
          %s601 = smul.addr %s600, 128
          %s602 = scalar_lea.hbm %s6, %s601
          %s604 = sshll.u32 %s591, 4
          %s605 = int_to_ptr.vmem [resolvable:$true] %s604
          %607 = dma.vmem_to_hbm [thread:$0]  %s605, 256, %s602, %s588
        $region52: #{tpu_custom_call.1} parent=43 // pred_fallthru
          _
      $region44: #{tpu_custom_call.1} parent=5 // pred_fallthru
        _
      %p608 = scmp.le.s32.totalorder 2, %s16
      // Predicated region
      $region53: #{tpu_custom_call.1} parent=5 // pred_check
        %p609 = pneg %p608
      $region54: #{tpu_custom_call.1} parent=5 // pred_check_branch
        %611 = sbr.rel (%p609) target = $region56
      $region55: #{tpu_custom_call.1} parent=5 // pred_region
        %s612 = ssub.s32 %s16, 2
        // Predicated region
        $region57: #{tpu_custom_call.1} parent=55 // pred_check
          %p613 = pneg %p202
        $region58: #{tpu_custom_call.1} parent=55 // pred_check_branch
          %615 = sbr.rel (%p613) target = $region60
        $region59: #{tpu_custom_call.1} parent=55 // pred_region
          %s616 = sand.u32 %s187, 1
          %s617 = scalar_lea.sflag [#allocation4], %s616
          %s618 = sand.u32 %s187, 1
          %s619 = smul.addr %s618, 16
          %s620 = scalar_lea.vmem [#allocation5], %s619
          %621 = dma.done %s617, 256
        $region60: #{tpu_custom_call.1} parent=55 // pred_fallthru
          _
      $region56: #{tpu_custom_call.1} parent=5 // pred_fallthru
        _
    $region6: #{tpu_custom_call.1} parent=1 // loop_footer
      %s20 = sadd.s32 1, %s16
    $region7: #{tpu_custom_call.1} parent=1 // loop_footer_branch
      %15 = sbr.rel target = $region3
    $region8: #{tpu_custom_call.1} parent=1 // loop_exit
      _
    %622 = vsyncpa [#allocation3], 1
    %s623 = scalar_lea.sflag [#allocation3], 1
    %624 = vsyncpa %s623, 1
    %625 = vsyncpa [#allocation4], 1
    %s626 = scalar_lea.sflag [#allocation4], 1
    %627 = vsyncpa %s626, 1

</llo_original>
